<compile_context>
chip_gen: v6e
topology: v6e:2x2x1
jax: 0.10.0
libtpu: 0.0.40
codegen_flags: <defaults>
</compile_context>

<pallas_src>
import functools

import jax
import jax.numpy as jnp
import numpy as np
from jax.experimental import pallas as pl
from jax.experimental.pallas import tpu as pltpu


def _round_up(x, m):
    return ((x + m - 1) // m) * m


def _pooling_matrix(hi, wi, ho, wo, kernel_size, stride, padding):
    """(hi*wi, ho*wo) f32 matrix with 1.0 where input pixel (ih, iw) lies inside
    the k x k window of output pixel (oh, ow).  Padded (out-of-bounds) window
    positions are simply absent; the kernel divides by k*k afterwards, giving
    count_include_pad=True semantics (identical to F.unfold(...).mean(dim=1))."""
    mat = np.zeros((hi * wi, ho * wo), dtype=np.float32)
    for oh in range(ho):
        for ow in range(wo):
            o = oh * wo + ow
            for di in range(kernel_size):
                ih = oh * stride + di - padding
                if ih < 0 or ih >= hi:
                    continue
                for dj in range(kernel_size):
                    iw = ow * stride + dj - padding
                    if iw < 0 or iw >= wi:
                        continue
                    mat[ih * wi + iw, o] = 1.0
    return jnp.asarray(mat)


def _avgpool_matmul_kernel(x_ref, p_ref, o_ref, *, inv_k2):
    """One grid step: (tbc, hi*wi) @ (hi*wi, ho*wo) on the MXU, scaled by 1/k^2.

    Single full-extent write of o_ref (no VMEM accumulator, no partial stores).
    precision=HIGHEST keeps the f32 contraction at f32 accuracy on the MXU.
    """
    acc = jnp.dot(
        x_ref[...].astype(jnp.float32),
        p_ref[...],
        preferred_element_type=jnp.float32,
        precision=jax.lax.Precision.HIGHEST,
    )
    o_ref[...] = (acc * inv_k2).astype(o_ref.dtype)


def _plan_tiles(bc, hiwi, howo, itemsize):
    """Pick the B*C tile (sublane axis), grid length, VMEM limit and buffering."""
    SUB = 8  # sublane granularity
    try:
        vmem_cap = int(pltpu.get_tpu_info().vmem_capacity_bytes)
    except Exception:  # pragma: no cover - conservative fallback
        vmem_cap = 64 * 1024 * 1024  # v7x per-TensorCore size

    # Tile-sizing budget: generous on 128-MiB parts (v5e/v6e), tighter on v7x.
    budget = min(vmem_cap // 4, 24 * 1024 * 1024)
    p_bytes = 2 * hiwi * howo * 4                         # pooling matrix (2 bufs)
    per_bc = 2 * hiwi * itemsize + 2 * howo * itemsize    # dbl-buffered in/out rows
    tbc_budget = max(SUB, (budget - p_bytes) // per_bc)
    # >= 4 grid steps when B*C is large enough (>= 2 steps per TensorCore on v7x).
    tbc_steps = _round_up(pl.cdiv(bc, 4), SUB)
    tbc = min(bc, tbc_budget, tbc_steps)
    if tbc < bc:
        tbc = max(SUB, (tbc // SUB) * SUB)
    num_steps = pl.cdiv(bc, tbc)

    vmem_limit = int(min(max(vmem_cap // 2, 16 * 1024 * 1024), 64 * 1024 * 1024))
    # 3-deep input buffering only where VMEM is plentiful (v5e/v6e, 128 MiB) and
    # the grid is long enough for the extra buffer to hide DMA latency.
    deep_input_buffering = (num_steps >= 4) and (vmem_cap >= 96 * 1024 * 1024)
    return tbc, num_steps, vmem_limit, deep_input_buffering


def avg_pool2d(x, kernel_size, stride=None, padding=0):
    """AvgPool2d forward (count_include_pad). x: [B, C, H, W] -> [B, C, Ho, Wo]."""
    if stride is None:
        stride = kernel_size
    b, c, hi, wi = x.shape
    ho = (hi + 2 * padding - kernel_size) // stride + 1
    wo = (wi + 2 * padding - kernel_size) // stride + 1
    bc, hiwi, howo = b * c, hi * wi, ho * wo

    # Free reshapes only -- no HBM transpose / pad passes around the kernel.
    x_flat = x.reshape(bc, hiwi)
    pool_mat = _pooling_matrix(hi, wi, ho, wo, kernel_size, stride, padding)

    # TODO(synk): very large spatial shapes (hi*wi*ho*wo*4 >> VMEM) would need a
    # K-tiled accumulation grid over hi*wi instead of a single resident P matrix.
    tbc, num_steps, vmem_limit, deep_buf = _plan_tiles(
        bc, hiwi, howo, x.dtype.itemsize)

    if deep_buf:
        x_spec = pl.BlockSpec((tbc, hiwi), lambda i: (i, 0),
                              pipeline_mode=pl.Buffered(3))
    else:
        x_spec = pl.BlockSpec((tbc, hiwi), lambda i: (i, 0))

    kernel = functools.partial(
        _avgpool_matmul_kernel, inv_k2=1.0 / float(kernel_size * kernel_size))

    out_flat = pl.pallas_call(
        kernel,
        out_shape=jax.ShapeDtypeStruct((bc, howo), x.dtype),
        grid_spec=pltpu.PrefetchScalarGridSpec(
            num_scalar_prefetch=0,
            grid=(num_steps,),
            in_specs=[
                x_spec,
                pl.BlockSpec((hiwi, howo), lambda i: (0, 0)),  # resident P
            ],
            out_specs=pl.BlockSpec((tbc, howo), lambda i: (i, 0)),
        ),
        compiler_params=pltpu.CompilerParams(
            dimension_semantics=("parallel",),
            vmem_limit_bytes=vmem_limit,
        ),
    )(x_flat, pool_mat)

    return out_flat.reshape(b, c, ho, wo)


def _reference_avg_pool2d(x, kernel_size, stride, padding):
    # Pure-JAX reference (sum reduce_window / k^2, count_include_pad=True).
    xp = jnp.pad(x, ((0, 0), (0, 0), (padding, padding), (padding, padding)))
    s = jax.lax.reduce_window(
        xp.astype(jnp.float32), 0.0, jax.lax.add,
        window_dimensions=(1, 1, kernel_size, kernel_size),
        window_strides=(1, 1, stride, stride),
        padding="VALID")
    return (s / float(kernel_size * kernel_size)).astype(x.dtype)


if __name__ == "__main__":
    key = jax.random.PRNGKey(0)

    # Config 1: canonical small shape; k=3, s=2, p=1 (windows overlap the pad).
    batch, channels, height, width = 2, 4, 16, 16
    x = jax.random.normal(key, (batch, channels, height, width), dtype=jnp.float32)
    out = jax.block_until_ready(avg_pool2d(x, kernel_size=3, stride=2, padding=1))
    ref = _reference_avg_pool2d(x, kernel_size=3, stride=2, padding=1)
    assert out.shape == ref.shape, (out.shape, ref.shape)
    assert jnp.allclose(out, ref, atol=1e-5, rtol=1e-5), "mismatch (k=3,s=2,p=1)"

    # Config 2: kernel=2, default stride (=kernel), no padding.
    out2 = jax.block_until_ready(avg_pool2d(x, kernel_size=2))
    ref2 = _reference_avg_pool2d(x, kernel_size=2, stride=2, padding=0)
    assert out2.shape == ref2.shape, (out2.shape, ref2.shape)
    assert jnp.allclose(out2, ref2, atol=1e-5, rtol=1e-5), "mismatch (k=2,s=2,p=0)"

    # Config 3: larger fused B*C (=256) exercises the multi-step tiled grid.
    x3 = jax.random.normal(jax.random.PRNGKey(1), (8, 32, 16, 16), dtype=jnp.float32)
    out3 = jax.block_until_ready(avg_pool2d(x3, kernel_size=3, stride=2, padding=1))
    ref3 = _reference_avg_pool2d(x3, kernel_size=3, stride=2, padding=1)
    assert out3.shape == ref3.shape, (out3.shape, ref3.shape)
    assert jnp.allclose(out3, ref3, atol=1e-5, rtol=1e-5), "mismatch (bc=256)"

    print("KERNEL_OK")
</pallas_src>

<mosaic_0001>
module attributes {stable_mosaic.version = 11 : i64} {
  func.func @_avgpool_matmul_kernel(%arg0: i32, %arg1: memref<8x256xf32, #tpu.memory_space<vmem>>, %arg2: memref<256x64xf32, #tpu.memory_space<vmem>>, %arg3: memref<8x64xf32, #tpu.memory_space<vmem>>) attributes {dimension_semantics = [#tpu.dimension_semantics<parallel>], iteration_bounds = array<i64: 1>, scalar_prefetch = 0 : i64, scratch_operands = 0 : i64, tpu.core_type = #tpu.core_type<tc>, window_params = [{transform_indices = @transform_0, window_bounds = array<i64: 8, 256>}, {pipeline_mode = #tpu.pipeline_mode<synchronous>, transform_indices = @transform_1, window_bounds = array<i64: 256, 64>}, {transform_indices = @transform_2, window_bounds = array<i64: 8, 64>}]} {
    %c0 = arith.constant 0 : index
    %c0_0 = arith.constant 0 : index
    %0 = vector.load %arg1[%c0, %c0_0] : memref<8x256xf32, #tpu.memory_space<vmem>>, vector<8x256xf32>
    %c0_1 = arith.constant 0 : index
    %c0_2 = arith.constant 0 : index
    %1 = vector.load %arg2[%c0_1, %c0_2] : memref<256x64xf32, #tpu.memory_space<vmem>>, vector<256x64xf32>
    %cst = arith.constant dense<0.000000e+00> : vector<8x64xf32>
    %2 = tpu.matmul %0, %1, %cst {dimension_numbers = #tpu.dot_dimension_numbers<[1], [0], [0], [1], [0, 0, 1, 1], [], []>, precision = #tpu.contract_precision<fp32>} : vector<8x256xf32>, vector<256x64xf32>, vector<8x64xf32> -> vector<8x64xf32>
    %cst_3 = arith.constant 0.111111112 : f32
    %3 = vector.broadcast %cst_3 : f32 to vector<8x64xf32>
    %4 = arith.mulf %2, %3 : vector<8x64xf32>
    %c0_4 = arith.constant 0 : index
    %c0_5 = arith.constant 0 : index
    %5 = vector.load %arg3[%c0_4, %c0_5] : memref<8x64xf32, #tpu.memory_space<vmem>>, vector<8x64xf32>
    tpu.vector_store %arg3[%c0_4, %c0_5], %4 {strides = array<i32>} : memref<8x64xf32, #tpu.memory_space<vmem>>, vector<8x64xf32>,
    return
  }
  func.func @transform_0(%arg0: i32) -> (i32, i32) {
    %c0_i32 = arith.constant 0 : i32
    %c0_i32_0 = arith.constant 0 : i32
    return %arg0, %c0_i32 : i32, i32
  }
  func.func @transform_1(%arg0: i32) -> (i32, i32) {
    %c0_i32 = arith.constant 0 : i32
    %c0_i32_0 = arith.constant 0 : i32
    %c0_i32_1 = arith.constant 0 : i32
    return %c0_i32, %c0_i32_0 : i32, i32
  }
  func.func @transform_2(%arg0: i32) -> (i32, i32) {
    %c0_i32 = arith.constant 0 : i32
    %c0_i32_0 = arith.constant 0 : i32
    return %arg0, %c0_i32 : i32, i32
  }
}

</mosaic_0001>

<llo_original>
// kernel: tpu_custom_call.1
$region0: #{tpu_custom_call.1}
  #allocation0 [shape = 'u32[]', space=smem, size = 0x4, offset = 0x4, fixed_abs, tag = 'smem constant byte address 0x4 - core index']
  #allocation1 [shape = 'u32[144,128]{1,0:T(1,128)}', space=vmem, size = 0x12000, scoped, tag = 'internal scratch']
  %s0 = inlined_call_operand.vmem [shape: f32[8,256], index: 0, kind: input, shape index: {}]
  %s1 = inlined_call_operand.vmem [shape: f32[256,64], index: 1, kind: input, shape index: {}]
  %s2 = inlined_call_operand.hbm [shape: f32[8,64], index: 2, kind: output, shape index: {}]
  %s3 = sld [smem:[#allocation0]]
  $region18: #{tpu_custom_call.1} parent=0
    _
  %s5 = ssub.s32 1, %s3
  %s6 = scalar_select 0, %s5, %s3
  $region1: #{tpu_custom_call.1} parent=0
    #allocation2 [shape = 'u8[4096]{0}', space=vmem, size = 0x1000, scoped, tag = 'output window, operand 0, single buffered']
    #allocation3 [shape = 's32[1]{0}', space=sflag, size = 0x4, scoped, tag = 'scoped memory for tpu_custom_call.1']
    %7 = vsyncpa [#allocation3], 0
    // Predicated region
    $region2: #{tpu_custom_call.1} parent=1 // pred_check
      _
    $region3: #{tpu_custom_call.1} parent=1 // pred_check_branch
      %9 = sbr.rel (0) target = $region5
    $region4: #{tpu_custom_call.1} parent=1 // pred_region
      _
    $region5: #{tpu_custom_call.1} parent=1 // pred_fallthru
      _
    // Predicated region
    $region6: #{tpu_custom_call.1} parent=1 // pred_check
      _
    $region7: #{tpu_custom_call.1} parent=1 // pred_check_branch
      %11 = sbr.rel (0) target = $region9
    $region8: #{tpu_custom_call.1} parent=1 // pred_region
      _
    $region9: #{tpu_custom_call.1} parent=1 // pred_fallthru
      _
    %v12 = vld [vmem:[%s0] sm:$0xff]
    %v13 = vld [vmem:[%s0 + $0x8] sm:$0xff]
    %v14 = vld [vmem:[%s1] sm:$0xff]
    %v15 = vld [vmem:[%s1 + $0x8] sm:$0xff]
    %v16 = vld [vmem:[%s1 + $0x10] sm:$0xff]
    %v17 = vld [vmem:[%s1 + $0x18] sm:$0xff]
    %v18 = vld [vmem:[%s1 + $0x20] sm:$0xff]
    %v19 = vld [vmem:[%s1 + $0x28] sm:$0xff]
    %v20 = vld [vmem:[%s1 + $0x30] sm:$0xff]
    %v21 = vld [vmem:[%s1 + $0x38] sm:$0xff]
    %v22 = vld [vmem:[%s1 + $0x40] sm:$0xff]
    %v23 = vld [vmem:[%s1 + $0x48] sm:$0xff]
    %v24 = vld [vmem:[%s1 + $0x50] sm:$0xff]
    %v25 = vld [vmem:[%s1 + $0x58] sm:$0xff]
    %v26 = vld [vmem:[%s1 + $0x60] sm:$0xff]
    %v27 = vld [vmem:[%s1 + $0x68] sm:$0xff]
    %v28 = vld [vmem:[%s1 + $0x70] sm:$0xff]
    %v29 = vld [vmem:[%s1 + $0x78] sm:$0xff]
    %v30 = vld [vmem:[%s1 + $0x80] sm:$0xff]
    %v31 = vld [vmem:[%s1 + $0x88] sm:$0xff]
    %v32 = vld [vmem:[%s1 + $0x90] sm:$0xff]
    %v33 = vld [vmem:[%s1 + $0x98] sm:$0xff]
    %v34 = vld [vmem:[%s1 + $0xa0] sm:$0xff]
    %v35 = vld [vmem:[%s1 + $0xa8] sm:$0xff]
    %v36 = vld [vmem:[%s1 + $0xb0] sm:$0xff]
    %v37 = vld [vmem:[%s1 + $0xb8] sm:$0xff]
    %v38 = vld [vmem:[%s1 + $0xc0] sm:$0xff]
    %v39 = vld [vmem:[%s1 + $0xc8] sm:$0xff]
    %v40 = vld [vmem:[%s1 + $0xd0] sm:$0xff]
    %v41 = vld [vmem:[%s1 + $0xd8] sm:$0xff]
    %v42 = vld [vmem:[%s1 + $0xe0] sm:$0xff]
    %v43 = vld [vmem:[%s1 + $0xe8] sm:$0xff]
    %v44 = vld [vmem:[%s1 + $0xf0] sm:$0xff]
    %v45 = vld [vmem:[%s1 + $0xf8] sm:$0xff]
    %46 = vmatprep.subr.mxu0 0.0
    %v47 = vand.u32 %v29, 4294901760
    %48 = vmatpush1.msra.mxu0 %v47
    %49 = vmatprep.subr.mxu0 0.0
    %v50 = vand.u32 %v28, 4294901760
    %51 = vmatpush1.msra.mxu0 %v50
    %52 = vmatprep.subr.mxu0 0.0
    %v53 = vand.u32 %v27, 4294901760
    %54 = vmatpush1.msra.mxu0 %v53
    %55 = vmatprep.subr.mxu0 0.0
    %v56 = vand.u32 %v26, 4294901760
    %57 = vmatpush1.msra.mxu0 %v56
    %58 = vmatprep.subr.mxu0 0.0
    %v59 = vand.u32 %v25, 4294901760
    %60 = vmatpush1.msra.mxu0 %v59
    %61 = vmatprep.subr.mxu0 0.0
    %v62 = vand.u32 %v24, 4294901760
    %63 = vmatpush1.msra.mxu0 %v62
    %64 = vmatprep.subr.mxu0 0.0
    %v65 = vand.u32 %v23, 4294901760
    %66 = vmatpush1.msra.mxu0 %v65
    %67 = vmatprep.subr.mxu0 0.0
    %v68 = vand.u32 %v22, 4294901760
    %69 = vmatpush1.msra.mxu0 %v68
    %70 = vmatprep.subr.mxu0 0.0
    %v71 = vand.u32 %v21, 4294901760
    %72 = vmatpush1.msra.mxu0 %v71
    %73 = vmatprep.subr.mxu0 0.0
    %v74 = vand.u32 %v20, 4294901760
    %75 = vmatpush1.msra.mxu0 %v74
    %76 = vmatprep.subr.mxu0 0.0
    %v77 = vand.u32 %v19, 4294901760
    %78 = vmatpush1.msra.mxu0 %v77
    %79 = vmatprep.subr.mxu0 0.0
    %v80 = vand.u32 %v18, 4294901760
    %81 = vmatpush1.msra.mxu0 %v80
    %82 = vmatprep.subr.mxu0 0.0
    %v83 = vand.u32 %v17, 4294901760
    %84 = vmatpush1.msra.mxu0 %v83
    %85 = vmatprep.subr.mxu0 0.0
    %v86 = vand.u32 %v16, 4294901760
    %87 = vmatpush1.msra.mxu0 %v86
    %88 = vmatprep.subr.mxu0 0.0
    %v89 = vand.u32 %v15, 4294901760
    %90 = vmatpush1.msra.mxu0 %v89
    %91 = vmatprep.subr.mxu0 0.0
    %v92 = vand.u32 %v14, 4294901760
    %93 = vmatpush1.msra.mxu0 %v92
    %94 = vmatprep.subr.mxu0 0.0
    %v95 = vand.u32 %v45, 4294901760
    %96 = vmatpush2.msra.mxu0 %v95
    %97 = vmatprep.subr.mxu0 0.0
    %v98 = vand.u32 %v44, 4294901760
    %99 = vmatpush2.msra.mxu0 %v98
    %100 = vmatprep.subr.mxu0 0.0
    %v101 = vand.u32 %v43, 4294901760
    %102 = vmatpush2.msra.mxu0 %v101
    %103 = vmatprep.subr.mxu0 0.0
    %v104 = vand.u32 %v42, 4294901760
    %105 = vmatpush2.msra.mxu0 %v104
    %106 = vmatprep.subr.mxu0 0.0
    %v107 = vand.u32 %v41, 4294901760
    %108 = vmatpush2.msra.mxu0 %v107
    %109 = vmatprep.subr.mxu0 0.0
    %v110 = vand.u32 %v40, 4294901760
    %111 = vmatpush2.msra.mxu0 %v110
    %112 = vmatprep.subr.mxu0 0.0
    %v113 = vand.u32 %v39, 4294901760
    %114 = vmatpush2.msra.mxu0 %v113
    %115 = vmatprep.subr.mxu0 0.0
    %v116 = vand.u32 %v38, 4294901760
    %117 = vmatpush2.msra.mxu0 %v116
    %118 = vmatprep.subr.mxu0 0.0
    %v119 = vand.u32 %v37, 4294901760
    %120 = vmatpush2.msra.mxu0 %v119
    %121 = vmatprep.subr.mxu0 0.0
    %v122 = vand.u32 %v36, 4294901760
    %123 = vmatpush2.msra.mxu0 %v122
    %124 = vmatprep.subr.mxu0 0.0
    %v125 = vand.u32 %v35, 4294901760
    %126 = vmatpush2.msra.mxu0 %v125
    %127 = vmatprep.subr.mxu0 0.0
    %v128 = vand.u32 %v34, 4294901760
    %129 = vmatpush2.msra.mxu0 %v128
    %130 = vmatprep.subr.mxu0 0.0
    %v131 = vand.u32 %v33, 4294901760
    %132 = vmatpush2.msra.mxu0 %v131
    %133 = vmatprep.subr.mxu0 0.0
    %v134 = vand.u32 %v32, 4294901760
    %135 = vmatpush2.msra.mxu0 %v134
    %136 = vmatprep.subr.mxu0 0.0
    %v137 = vand.u32 %v31, 4294901760
    %138 = vmatpush2.msra.mxu0 %v137
    %139 = vmatprep.subr.mxu0 0.0
    %v140 = vand.u32 %v30, 4294901760
    %141 = vmatpush2.msra.mxu0 %v140
    %v142 = vand.u32 %v13, 4294901760
    %v143 = vsub.f32 %v13, %v142
    %v144 = vand.u32 %v143, 4294901760
    %v145 = vsub.f32 %v143, %v144
    %v146 = vand.u32 %v145, 4294901760
    %147 = vmatprep.mubr.f32.mxu0 %v146
    %v148 = vand.u32 %v12, 4294901760
    %v149 = vsub.f32 %v12, %v148
    %v150 = vand.u32 %v149, 4294901760
    %v151 = vsub.f32 %v149, %v150
    %v152 = vand.u32 %v151, 4294901760
    %153 = vmatmul.mubr.f32.gmra.mxu0 %v152
    %v154 = vpop.f32.mrf.mxu0
    %v155 = vadd.f32 0.0, %v154
    %v156 = vpop.f32.mrf.mxu0
    %157 = vdwg.mxu0
    %158 = vmatprep.subr.mxu0 0.0
    %v159 = vand.u32 %v29, 4294901760
    %v160 = vsub.f32 %v29, %v159
    %v161 = vand.u32 %v160, 4294901760
    %v162 = vsub.f32 %v160, %v161
    %v163 = vand.u32 %v162, 4294901760
    %164 = vmatpush1.msra.mxu0 %v163
    %165 = vmatprep.subr.mxu0 0.0
    %v166 = vand.u32 %v28, 4294901760
    %v167 = vsub.f32 %v28, %v166
    %v168 = vand.u32 %v167, 4294901760
    %v169 = vsub.f32 %v167, %v168
    %v170 = vand.u32 %v169, 4294901760
    %171 = vmatpush1.msra.mxu0 %v170
    %172 = vmatprep.subr.mxu0 0.0
    %v173 = vand.u32 %v27, 4294901760
    %v174 = vsub.f32 %v27, %v173
    %v175 = vand.u32 %v174, 4294901760
    %v176 = vsub.f32 %v174, %v175
    %v177 = vand.u32 %v176, 4294901760
    %178 = vmatpush1.msra.mxu0 %v177
    %179 = vmatprep.subr.mxu0 0.0
    %v180 = vand.u32 %v26, 4294901760
    %v181 = vsub.f32 %v26, %v180
    %v182 = vand.u32 %v181, 4294901760
    %v183 = vsub.f32 %v181, %v182
    %v184 = vand.u32 %v183, 4294901760
    %185 = vmatpush1.msra.mxu0 %v184
    %186 = vmatprep.subr.mxu0 0.0
    %v187 = vand.u32 %v25, 4294901760
    %v188 = vsub.f32 %v25, %v187
    %v189 = vand.u32 %v188, 4294901760
    %v190 = vsub.f32 %v188, %v189
    %v191 = vand.u32 %v190, 4294901760
    %192 = vmatpush1.msra.mxu0 %v191
    %193 = vmatprep.subr.mxu0 0.0
    %v194 = vand.u32 %v24, 4294901760
    %v195 = vsub.f32 %v24, %v194
    %v196 = vand.u32 %v195, 4294901760
    %v197 = vsub.f32 %v195, %v196
    %v198 = vand.u32 %v197, 4294901760
    %199 = vmatpush1.msra.mxu0 %v198
    %200 = vmatprep.subr.mxu0 0.0
    %v201 = vand.u32 %v23, 4294901760
    %v202 = vsub.f32 %v23, %v201
    %v203 = vand.u32 %v202, 4294901760
    %v204 = vsub.f32 %v202, %v203
    %v205 = vand.u32 %v204, 4294901760
    %206 = vmatpush1.msra.mxu0 %v205
    %207 = vmatprep.subr.mxu0 0.0
    %v208 = vand.u32 %v22, 4294901760
    %v209 = vsub.f32 %v22, %v208
    %v210 = vand.u32 %v209, 4294901760
    %v211 = vsub.f32 %v209, %v210
    %v212 = vand.u32 %v211, 4294901760
    %213 = vmatpush1.msra.mxu0 %v212
    %214 = vmatprep.subr.mxu0 0.0
    %v215 = vand.u32 %v21, 4294901760
    %v216 = vsub.f32 %v21, %v215
    %v217 = vand.u32 %v216, 4294901760
    %v218 = vsub.f32 %v216, %v217
    %v219 = vand.u32 %v218, 4294901760
    %220 = vmatpush1.msra.mxu0 %v219
    %221 = vmatprep.subr.mxu0 0.0
    %v222 = vand.u32 %v20, 4294901760
    %v223 = vsub.f32 %v20, %v222
    %v224 = vand.u32 %v223, 4294901760
    %v225 = vsub.f32 %v223, %v224
    %v226 = vand.u32 %v225, 4294901760
    %227 = vmatpush1.msra.mxu0 %v226
    %228 = vmatprep.subr.mxu0 0.0
    %v229 = vand.u32 %v19, 4294901760
    %v230 = vsub.f32 %v19, %v229
    %v231 = vand.u32 %v230, 4294901760
    %v232 = vsub.f32 %v230, %v231
    %v233 = vand.u32 %v232, 4294901760
    %234 = vmatpush1.msra.mxu0 %v233
    %235 = vmatprep.subr.mxu0 0.0
    %v236 = vand.u32 %v18, 4294901760
    %v237 = vsub.f32 %v18, %v236
    %v238 = vand.u32 %v237, 4294901760
    %v239 = vsub.f32 %v237, %v238
    %v240 = vand.u32 %v239, 4294901760
    %241 = vmatpush1.msra.mxu0 %v240
    %242 = vmatprep.subr.mxu0 0.0
    %v243 = vand.u32 %v17, 4294901760
    %v244 = vsub.f32 %v17, %v243
    %v245 = vand.u32 %v244, 4294901760
    %v246 = vsub.f32 %v244, %v245
    %v247 = vand.u32 %v246, 4294901760
    %248 = vmatpush1.msra.mxu0 %v247
    %249 = vmatprep.subr.mxu0 0.0
    %v250 = vand.u32 %v16, 4294901760
    %v251 = vsub.f32 %v16, %v250
    %v252 = vand.u32 %v251, 4294901760
    %v253 = vsub.f32 %v251, %v252
    %v254 = vand.u32 %v253, 4294901760
    %255 = vmatpush1.msra.mxu0 %v254
    %256 = vmatprep.subr.mxu0 0.0
    %v257 = vand.u32 %v15, 4294901760
    %v258 = vsub.f32 %v15, %v257
    %v259 = vand.u32 %v258, 4294901760
    %v260 = vsub.f32 %v258, %v259
    %v261 = vand.u32 %v260, 4294901760
    %262 = vmatpush1.msra.mxu0 %v261
    %263 = vmatprep.subr.mxu0 0.0
    %v264 = vand.u32 %v14, 4294901760
    %v265 = vsub.f32 %v14, %v264
    %v266 = vand.u32 %v265, 4294901760
    %v267 = vsub.f32 %v265, %v266
    %v268 = vand.u32 %v267, 4294901760
    %269 = vmatpush1.msra.mxu0 %v268
    %270 = vmatprep.subr.mxu0 0.0
    %v271 = vand.u32 %v45, 4294901760
    %v272 = vsub.f32 %v45, %v271
    %v273 = vand.u32 %v272, 4294901760
    %v274 = vsub.f32 %v272, %v273
    %v275 = vand.u32 %v274, 4294901760
    %276 = vmatpush2.msra.mxu0 %v275
    %277 = vmatprep.subr.mxu0 0.0
    %v278 = vand.u32 %v44, 4294901760
    %v279 = vsub.f32 %v44, %v278
    %v280 = vand.u32 %v279, 4294901760
    %v281 = vsub.f32 %v279, %v280
    %v282 = vand.u32 %v281, 4294901760
    %283 = vmatpush2.msra.mxu0 %v282
    %284 = vmatprep.subr.mxu0 0.0
    %v285 = vand.u32 %v43, 4294901760
    %v286 = vsub.f32 %v43, %v285
    %v287 = vand.u32 %v286, 4294901760
    %v288 = vsub.f32 %v286, %v287
    %v289 = vand.u32 %v288, 4294901760
    %290 = vmatpush2.msra.mxu0 %v289
    %291 = vmatprep.subr.mxu0 0.0
    %v292 = vand.u32 %v42, 4294901760
    %v293 = vsub.f32 %v42, %v292
    %v294 = vand.u32 %v293, 4294901760
    %v295 = vsub.f32 %v293, %v294
    %v296 = vand.u32 %v295, 4294901760
    %297 = vmatpush2.msra.mxu0 %v296
    %298 = vmatprep.subr.mxu0 0.0
    %v299 = vand.u32 %v41, 4294901760
    %v300 = vsub.f32 %v41, %v299
    %v301 = vand.u32 %v300, 4294901760
    %v302 = vsub.f32 %v300, %v301
    %v303 = vand.u32 %v302, 4294901760
    %304 = vmatpush2.msra.mxu0 %v303
    %305 = vmatprep.subr.mxu0 0.0
    %v306 = vand.u32 %v40, 4294901760
    %v307 = vsub.f32 %v40, %v306
    %v308 = vand.u32 %v307, 4294901760
    %v309 = vsub.f32 %v307, %v308
    %v310 = vand.u32 %v309, 4294901760
    %311 = vmatpush2.msra.mxu0 %v310
    %312 = vmatprep.subr.mxu0 0.0
    %v313 = vand.u32 %v39, 4294901760
    %v314 = vsub.f32 %v39, %v313
    %v315 = vand.u32 %v314, 4294901760
    %v316 = vsub.f32 %v314, %v315
    %v317 = vand.u32 %v316, 4294901760
    %318 = vmatpush2.msra.mxu0 %v317
    %319 = vmatprep.subr.mxu0 0.0
    %v320 = vand.u32 %v38, 4294901760
    %v321 = vsub.f32 %v38, %v320
    %v322 = vand.u32 %v321, 4294901760
    %v323 = vsub.f32 %v321, %v322
    %v324 = vand.u32 %v323, 4294901760
    %325 = vmatpush2.msra.mxu0 %v324
    %326 = vmatprep.subr.mxu0 0.0
    %v327 = vand.u32 %v37, 4294901760
    %v328 = vsub.f32 %v37, %v327
    %v329 = vand.u32 %v328, 4294901760
    %v330 = vsub.f32 %v328, %v329
    %v331 = vand.u32 %v330, 4294901760
    %332 = vmatpush2.msra.mxu0 %v331
    %333 = vmatprep.subr.mxu0 0.0
    %v334 = vand.u32 %v36, 4294901760
    %v335 = vsub.f32 %v36, %v334
    %v336 = vand.u32 %v335, 4294901760
    %v337 = vsub.f32 %v335, %v336
    %v338 = vand.u32 %v337, 4294901760
    %339 = vmatpush2.msra.mxu0 %v338
    %340 = vmatprep.subr.mxu0 0.0
    %v341 = vand.u32 %v35, 4294901760
    %v342 = vsub.f32 %v35, %v341
    %v343 = vand.u32 %v342, 4294901760
    %v344 = vsub.f32 %v342, %v343
    %v345 = vand.u32 %v344, 4294901760
    %346 = vmatpush2.msra.mxu0 %v345
    %347 = vmatprep.subr.mxu0 0.0
    %v348 = vand.u32 %v34, 4294901760
    %v349 = vsub.f32 %v34, %v348
    %v350 = vand.u32 %v349, 4294901760
    %v351 = vsub.f32 %v349, %v350
    %v352 = vand.u32 %v351, 4294901760
    %353 = vmatpush2.msra.mxu0 %v352
    %354 = vmatprep.subr.mxu0 0.0
    %v355 = vand.u32 %v33, 4294901760
    %v356 = vsub.f32 %v33, %v355
    %v357 = vand.u32 %v356, 4294901760
    %v358 = vsub.f32 %v356, %v357
    %v359 = vand.u32 %v358, 4294901760
    %360 = vmatpush2.msra.mxu0 %v359
    %361 = vmatprep.subr.mxu0 0.0
    %v362 = vand.u32 %v32, 4294901760
    %v363 = vsub.f32 %v32, %v362
    %v364 = vand.u32 %v363, 4294901760
    %v365 = vsub.f32 %v363, %v364
    %v366 = vand.u32 %v365, 4294901760
    %367 = vmatpush2.msra.mxu0 %v366
    %368 = vmatprep.subr.mxu0 0.0
    %v369 = vand.u32 %v31, 4294901760
    %v370 = vsub.f32 %v31, %v369
    %v371 = vand.u32 %v370, 4294901760
    %v372 = vsub.f32 %v370, %v371
    %v373 = vand.u32 %v372, 4294901760
    %374 = vmatpush2.msra.mxu0 %v373
    %375 = vmatprep.subr.mxu0 0.0
    %v376 = vand.u32 %v30, 4294901760
    %v377 = vsub.f32 %v30, %v376
    %v378 = vand.u32 %v377, 4294901760
    %v379 = vsub.f32 %v377, %v378
    %v380 = vand.u32 %v379, 4294901760
    %381 = vmatpush2.msra.mxu0 %v380
    %v382 = vand.u32 %v13, 4294901760
    %383 = vmatprep.mubr.f32.mxu0 %v382
    %v384 = vand.u32 %v12, 4294901760
    %385 = vmatmul.mubr.f32.gmra.mxu0 %v384
    %v386 = vpop.f32.mrf.mxu0
    %v387 = vadd.f32 %v155, %v386
    %v388 = vpop.f32.mrf.mxu0
    %389 = vdwg.mxu0
    %390 = vmatprep.subr.mxu0 0.0
    %v391 = vand.u32 %v29, 4294901760
    %v392 = vsub.f32 %v29, %v391
    %393 = vmatpush1.msra.mxu0 %v392
    %394 = vmatprep.subr.mxu0 0.0
    %v395 = vand.u32 %v28, 4294901760
    %v396 = vsub.f32 %v28, %v395
    %397 = vmatpush1.msra.mxu0 %v396
    %398 = vmatprep.subr.mxu0 0.0
    %v399 = vand.u32 %v27, 4294901760
    %v400 = vsub.f32 %v27, %v399
    %401 = vmatpush1.msra.mxu0 %v400
    %402 = vmatprep.subr.mxu0 0.0
    %v403 = vand.u32 %v26, 4294901760
    %v404 = vsub.f32 %v26, %v403
    %405 = vmatpush1.msra.mxu0 %v404
    %406 = vmatprep.subr.mxu0 0.0
    %v407 = vand.u32 %v25, 4294901760
    %v408 = vsub.f32 %v25, %v407
    %409 = vmatpush1.msra.mxu0 %v408
    %410 = vmatprep.subr.mxu0 0.0
    %v411 = vand.u32 %v24, 4294901760
    %v412 = vsub.f32 %v24, %v411
    %413 = vmatpush1.msra.mxu0 %v412
    %414 = vmatprep.subr.mxu0 0.0
    %v415 = vand.u32 %v23, 4294901760
    %v416 = vsub.f32 %v23, %v415
    %417 = vmatpush1.msra.mxu0 %v416
    %418 = vmatprep.subr.mxu0 0.0
    %v419 = vand.u32 %v22, 4294901760
    %v420 = vsub.f32 %v22, %v419
    %421 = vmatpush1.msra.mxu0 %v420
    %422 = vmatprep.subr.mxu0 0.0
    %v423 = vand.u32 %v21, 4294901760
    %v424 = vsub.f32 %v21, %v423
    %425 = vmatpush1.msra.mxu0 %v424
    %426 = vmatprep.subr.mxu0 0.0
    %v427 = vand.u32 %v20, 4294901760
    %v428 = vsub.f32 %v20, %v427
    %429 = vmatpush1.msra.mxu0 %v428
    %430 = vmatprep.subr.mxu0 0.0
    %v431 = vand.u32 %v19, 4294901760
    %v432 = vsub.f32 %v19, %v431
    %433 = vmatpush1.msra.mxu0 %v432
    %434 = vmatprep.subr.mxu0 0.0
    %v435 = vand.u32 %v18, 4294901760
    %v436 = vsub.f32 %v18, %v435
    %437 = vmatpush1.msra.mxu0 %v436
    %438 = vmatprep.subr.mxu0 0.0
    %v439 = vand.u32 %v17, 4294901760
    %v440 = vsub.f32 %v17, %v439
    %441 = vmatpush1.msra.mxu0 %v440
    %442 = vmatprep.subr.mxu0 0.0
    %v443 = vand.u32 %v16, 4294901760
    %v444 = vsub.f32 %v16, %v443
    %445 = vmatpush1.msra.mxu0 %v444
    %446 = vmatprep.subr.mxu0 0.0
    %v447 = vand.u32 %v15, 4294901760
    %v448 = vsub.f32 %v15, %v447
    %449 = vmatpush1.msra.mxu0 %v448
    %450 = vmatprep.subr.mxu0 0.0
    %v451 = vand.u32 %v14, 4294901760
    %v452 = vsub.f32 %v14, %v451
    %453 = vmatpush1.msra.mxu0 %v452
    %454 = vmatprep.subr.mxu0 0.0
    %v455 = vand.u32 %v45, 4294901760
    %v456 = vsub.f32 %v45, %v455
    %457 = vmatpush2.msra.mxu0 %v456
    %458 = vmatprep.subr.mxu0 0.0
    %v459 = vand.u32 %v44, 4294901760
    %v460 = vsub.f32 %v44, %v459
    %461 = vmatpush2.msra.mxu0 %v460
    %462 = vmatprep.subr.mxu0 0.0
    %v463 = vand.u32 %v43, 4294901760
    %v464 = vsub.f32 %v43, %v463
    %465 = vmatpush2.msra.mxu0 %v464
    %466 = vmatprep.subr.mxu0 0.0
    %v467 = vand.u32 %v42, 4294901760
    %v468 = vsub.f32 %v42, %v467
    %469 = vmatpush2.msra.mxu0 %v468
    %470 = vmatprep.subr.mxu0 0.0
    %v471 = vand.u32 %v41, 4294901760
    %v472 = vsub.f32 %v41, %v471
    %473 = vmatpush2.msra.mxu0 %v472
    %474 = vmatprep.subr.mxu0 0.0
    %v475 = vand.u32 %v40, 4294901760
    %v476 = vsub.f32 %v40, %v475
    %477 = vmatpush2.msra.mxu0 %v476
    %478 = vmatprep.subr.mxu0 0.0
    %v479 = vand.u32 %v39, 4294901760
    %v480 = vsub.f32 %v39, %v479
    %481 = vmatpush2.msra.mxu0 %v480
    %482 = vmatprep.subr.mxu0 0.0
    %v483 = vand.u32 %v38, 4294901760
    %v484 = vsub.f32 %v38, %v483
    %485 = vmatpush2.msra.mxu0 %v484
    %486 = vmatprep.subr.mxu0 0.0
    %v487 = vand.u32 %v37, 4294901760
    %v488 = vsub.f32 %v37, %v487
    %489 = vmatpush2.msra.mxu0 %v488
    %490 = vmatprep.subr.mxu0 0.0
    %v491 = vand.u32 %v36, 4294901760
    %v492 = vsub.f32 %v36, %v491
    %493 = vmatpush2.msra.mxu0 %v492
    %494 = vmatprep.subr.mxu0 0.0
    %v495 = vand.u32 %v35, 4294901760
    %v496 = vsub.f32 %v35, %v495
    %497 = vmatpush2.msra.mxu0 %v496
    %498 = vmatprep.subr.mxu0 0.0
    %v499 = vand.u32 %v34, 4294901760
    %v500 = vsub.f32 %v34, %v499
    %501 = vmatpush2.msra.mxu0 %v500
    %502 = vmatprep.subr.mxu0 0.0
    %v503 = vand.u32 %v33, 4294901760
    %v504 = vsub.f32 %v33, %v503
    %505 = vmatpush2.msra.mxu0 %v504
    %506 = vmatprep.subr.mxu0 0.0
    %v507 = vand.u32 %v32, 4294901760
    %v508 = vsub.f32 %v32, %v507
    %509 = vmatpush2.msra.mxu0 %v508
    %510 = vmatprep.subr.mxu0 0.0
    %v511 = vand.u32 %v31, 4294901760
    %v512 = vsub.f32 %v31, %v511
    %513 = vmatpush2.msra.mxu0 %v512
    %514 = vmatprep.subr.mxu0 0.0
    %v515 = vand.u32 %v30, 4294901760
    %v516 = vsub.f32 %v30, %v515
    %517 = vmatpush2.msra.mxu0 %v516
    %v518 = vand.u32 %v13, 4294901760
    %v519 = vsub.f32 %v13, %v518
    %520 = vmatprep.mubr.f32.mxu0 %v519
    %v521 = vand.u32 %v12, 4294901760
    %v522 = vsub.f32 %v12, %v521
    %523 = vmatmul.mubr.f32.gmra.mxu0 %v522
    %v524 = vpop.f32.mrf.mxu0
    %v525 = vadd.f32 %v387, %v524
    %v526 = vpop.f32.mrf.mxu0
    %527 = vdwg.mxu0
    %528 = vmatprep.subr.mxu0 0.0
    %v529 = vand.u32 %v29, 4294901760
    %530 = vmatpush1.msra.mxu0 %v529
    %531 = vmatprep.subr.mxu0 0.0
    %v532 = vand.u32 %v28, 4294901760
    %533 = vmatpush1.msra.mxu0 %v532
    %534 = vmatprep.subr.mxu0 0.0
    %v535 = vand.u32 %v27, 4294901760
    %536 = vmatpush1.msra.mxu0 %v535
    %537 = vmatprep.subr.mxu0 0.0
    %v538 = vand.u32 %v26, 4294901760
    %539 = vmatpush1.msra.mxu0 %v538
    %540 = vmatprep.subr.mxu0 0.0
    %v541 = vand.u32 %v25, 4294901760
    %542 = vmatpush1.msra.mxu0 %v541
    %543 = vmatprep.subr.mxu0 0.0
    %v544 = vand.u32 %v24, 4294901760
    %545 = vmatpush1.msra.mxu0 %v544
    %546 = vmatprep.subr.mxu0 0.0
    %v547 = vand.u32 %v23, 4294901760
    %548 = vmatpush1.msra.mxu0 %v547
    %549 = vmatprep.subr.mxu0 0.0
    %v550 = vand.u32 %v22, 4294901760
    %551 = vmatpush1.msra.mxu0 %v550
    %552 = vmatprep.subr.mxu0 0.0
    %v553 = vand.u32 %v21, 4294901760
    %554 = vmatpush1.msra.mxu0 %v553
    %555 = vmatprep.subr.mxu0 0.0
    %v556 = vand.u32 %v20, 4294901760
    %557 = vmatpush1.msra.mxu0 %v556
    %558 = vmatprep.subr.mxu0 0.0
    %v559 = vand.u32 %v19, 4294901760
    %560 = vmatpush1.msra.mxu0 %v559
    %561 = vmatprep.subr.mxu0 0.0
    %v562 = vand.u32 %v18, 4294901760
    %563 = vmatpush1.msra.mxu0 %v562
    %564 = vmatprep.subr.mxu0 0.0
    %v565 = vand.u32 %v17, 4294901760
    %566 = vmatpush1.msra.mxu0 %v565
    %567 = vmatprep.subr.mxu0 0.0
    %v568 = vand.u32 %v16, 4294901760
    %569 = vmatpush1.msra.mxu0 %v568
    %570 = vmatprep.subr.mxu0 0.0
    %v571 = vand.u32 %v15, 4294901760
    %572 = vmatpush1.msra.mxu0 %v571
    %573 = vmatprep.subr.mxu0 0.0
    %v574 = vand.u32 %v14, 4294901760
    %575 = vmatpush1.msra.mxu0 %v574
    %576 = vmatprep.subr.mxu0 0.0
    %v577 = vand.u32 %v45, 4294901760
    %578 = vmatpush2.msra.mxu0 %v577
    %579 = vmatprep.subr.mxu0 0.0
    %v580 = vand.u32 %v44, 4294901760
    %581 = vmatpush2.msra.mxu0 %v580
    %582 = vmatprep.subr.mxu0 0.0
    %v583 = vand.u32 %v43, 4294901760
    %584 = vmatpush2.msra.mxu0 %v583
    %585 = vmatprep.subr.mxu0 0.0
    %v586 = vand.u32 %v42, 4294901760
    %587 = vmatpush2.msra.mxu0 %v586
    %588 = vmatprep.subr.mxu0 0.0
    %v589 = vand.u32 %v41, 4294901760
    %590 = vmatpush2.msra.mxu0 %v589
    %591 = vmatprep.subr.mxu0 0.0
    %v592 = vand.u32 %v40, 4294901760
    %593 = vmatpush2.msra.mxu0 %v592
    %594 = vmatprep.subr.mxu0 0.0
    %v595 = vand.u32 %v39, 4294901760
    %596 = vmatpush2.msra.mxu0 %v595
    %597 = vmatprep.subr.mxu0 0.0
    %v598 = vand.u32 %v38, 4294901760
    %599 = vmatpush2.msra.mxu0 %v598
    %600 = vmatprep.subr.mxu0 0.0
    %v601 = vand.u32 %v37, 4294901760
    %602 = vmatpush2.msra.mxu0 %v601
    %603 = vmatprep.subr.mxu0 0.0
    %v604 = vand.u32 %v36, 4294901760
    %605 = vmatpush2.msra.mxu0 %v604
    %606 = vmatprep.subr.mxu0 0.0
    %v607 = vand.u32 %v35, 4294901760
    %608 = vmatpush2.msra.mxu0 %v607
    %609 = vmatprep.subr.mxu0 0.0
    %v610 = vand.u32 %v34, 4294901760
    %611 = vmatpush2.msra.mxu0 %v610
    %612 = vmatprep.subr.mxu0 0.0
    %v613 = vand.u32 %v33, 4294901760
    %614 = vmatpush2.msra.mxu0 %v613
    %615 = vmatprep.subr.mxu0 0.0
    %v616 = vand.u32 %v32, 4294901760
    %617 = vmatpush2.msra.mxu0 %v616
    %618 = vmatprep.subr.mxu0 0.0
    %v619 = vand.u32 %v31, 4294901760
    %620 = vmatpush2.msra.mxu0 %v619
    %621 = vmatprep.subr.mxu0 0.0
    %v622 = vand.u32 %v30, 4294901760
    %623 = vmatpush2.msra.mxu0 %v622
    %v624 = vand.u32 %v13, 4294901760
    %v625 = vsub.f32 %v13, %v624
    %v626 = vand.u32 %v625, 4294901760
    %627 = vmatprep.mubr.f32.mxu0 %v626
    %v628 = vand.u32 %v12, 4294901760
    %v629 = vsub.f32 %v12, %v628
    %v630 = vand.u32 %v629, 4294901760
    %631 = vmatmul.mubr.f32.gmra.mxu0 %v630
    %v632 = vpop.f32.mrf.mxu0
    %v633 = vadd.f32 %v525, %v632
    %v634 = vpop.f32.mrf.mxu0
    %635 = vdwg.mxu0
    %636 = vmatprep.subr.mxu0 0.0
    %v637 = vand.u32 %v29, 4294901760
    %v638 = vsub.f32 %v29, %v637
    %v639 = vand.u32 %v638, 4294901760
    %640 = vmatpush1.msra.mxu0 %v639
    %641 = vmatprep.subr.mxu0 0.0
    %v642 = vand.u32 %v28, 4294901760
    %v643 = vsub.f32 %v28, %v642
    %v644 = vand.u32 %v643, 4294901760
    %645 = vmatpush1.msra.mxu0 %v644
    %646 = vmatprep.subr.mxu0 0.0
    %v647 = vand.u32 %v27, 4294901760
    %v648 = vsub.f32 %v27, %v647
    %v649 = vand.u32 %v648, 4294901760
    %650 = vmatpush1.msra.mxu0 %v649
    %651 = vmatprep.subr.mxu0 0.0
    %v652 = vand.u32 %v26, 4294901760
    %v653 = vsub.f32 %v26, %v652
    %v654 = vand.u32 %v653, 4294901760
    %655 = vmatpush1.msra.mxu0 %v654
    %656 = vmatprep.subr.mxu0 0.0
    %v657 = vand.u32 %v25, 4294901760
    %v658 = vsub.f32 %v25, %v657
    %v659 = vand.u32 %v658, 4294901760
    %660 = vmatpush1.msra.mxu0 %v659
    %661 = vmatprep.subr.mxu0 0.0
    %v662 = vand.u32 %v24, 4294901760
    %v663 = vsub.f32 %v24, %v662
    %v664 = vand.u32 %v663, 4294901760
    %665 = vmatpush1.msra.mxu0 %v664
    %666 = vmatprep.subr.mxu0 0.0
    %v667 = vand.u32 %v23, 4294901760
    %v668 = vsub.f32 %v23, %v667
    %v669 = vand.u32 %v668, 4294901760
    %670 = vmatpush1.msra.mxu0 %v669
    %671 = vmatprep.subr.mxu0 0.0
    %v672 = vand.u32 %v22, 4294901760
    %v673 = vsub.f32 %v22, %v672
    %v674 = vand.u32 %v673, 4294901760
    %675 = vmatpush1.msra.mxu0 %v674
    %676 = vmatprep.subr.mxu0 0.0
    %v677 = vand.u32 %v21, 4294901760
    %v678 = vsub.f32 %v21, %v677
    %v679 = vand.u32 %v678, 4294901760
    %680 = vmatpush1.msra.mxu0 %v679
    %681 = vmatprep.subr.mxu0 0.0
    %v682 = vand.u32 %v20, 4294901760
    %v683 = vsub.f32 %v20, %v682
    %v684 = vand.u32 %v683, 4294901760
    %685 = vmatpush1.msra.mxu0 %v684
    %686 = vmatprep.subr.mxu0 0.0
    %v687 = vand.u32 %v19, 4294901760
    %v688 = vsub.f32 %v19, %v687
    %v689 = vand.u32 %v688, 4294901760
    %690 = vmatpush1.msra.mxu0 %v689
    %691 = vmatprep.subr.mxu0 0.0
    %v692 = vand.u32 %v18, 4294901760
    %v693 = vsub.f32 %v18, %v692
    %v694 = vand.u32 %v693, 4294901760
    %695 = vmatpush1.msra.mxu0 %v694
    %696 = vmatprep.subr.mxu0 0.0
    %v697 = vand.u32 %v17, 4294901760
    %v698 = vsub.f32 %v17, %v697
    %v699 = vand.u32 %v698, 4294901760
    %700 = vmatpush1.msra.mxu0 %v699
    %701 = vmatprep.subr.mxu0 0.0
    %v702 = vand.u32 %v16, 4294901760
    %v703 = vsub.f32 %v16, %v702
    %v704 = vand.u32 %v703, 4294901760
    %705 = vmatpush1.msra.mxu0 %v704
    %706 = vmatprep.subr.mxu0 0.0
    %v707 = vand.u32 %v15, 4294901760
    %v708 = vsub.f32 %v15, %v707
    %v709 = vand.u32 %v708, 4294901760
    %710 = vmatpush1.msra.mxu0 %v709
    %711 = vmatprep.subr.mxu0 0.0
    %v712 = vand.u32 %v14, 4294901760
    %v713 = vsub.f32 %v14, %v712
    %v714 = vand.u32 %v713, 4294901760
    %715 = vmatpush1.msra.mxu0 %v714
    %716 = vmatprep.subr.mxu0 0.0
    %v717 = vand.u32 %v45, 4294901760
    %v718 = vsub.f32 %v45, %v717
    %v719 = vand.u32 %v718, 4294901760
    %720 = vmatpush2.msra.mxu0 %v719
    %721 = vmatprep.subr.mxu0 0.0
    %v722 = vand.u32 %v44, 4294901760
    %v723 = vsub.f32 %v44, %v722
    %v724 = vand.u32 %v723, 4294901760
    %725 = vmatpush2.msra.mxu0 %v724
    %726 = vmatprep.subr.mxu0 0.0
    %v727 = vand.u32 %v43, 4294901760
    %v728 = vsub.f32 %v43, %v727
    %v729 = vand.u32 %v728, 4294901760
    %730 = vmatpush2.msra.mxu0 %v729
    %731 = vmatprep.subr.mxu0 0.0
    %v732 = vand.u32 %v42, 4294901760
    %v733 = vsub.f32 %v42, %v732
    %v734 = vand.u32 %v733, 4294901760
    %735 = vmatpush2.msra.mxu0 %v734
    %736 = vmatprep.subr.mxu0 0.0
    %v737 = vand.u32 %v41, 4294901760
    %v738 = vsub.f32 %v41, %v737
    %v739 = vand.u32 %v738, 4294901760
    %740 = vmatpush2.msra.mxu0 %v739
    %741 = vmatprep.subr.mxu0 0.0
    %v742 = vand.u32 %v40, 4294901760
    %v743 = vsub.f32 %v40, %v742
    %v744 = vand.u32 %v743, 4294901760
    %745 = vmatpush2.msra.mxu0 %v744
    %746 = vmatprep.subr.mxu0 0.0
    %v747 = vand.u32 %v39, 4294901760
    %v748 = vsub.f32 %v39, %v747
    %v749 = vand.u32 %v748, 4294901760
    %750 = vmatpush2.msra.mxu0 %v749
    %751 = vmatprep.subr.mxu0 0.0
    %v752 = vand.u32 %v38, 4294901760
    %v753 = vsub.f32 %v38, %v752
    %v754 = vand.u32 %v753, 4294901760
    %755 = vmatpush2.msra.mxu0 %v754
    %756 = vmatprep.subr.mxu0 0.0
    %v757 = vand.u32 %v37, 4294901760
    %v758 = vsub.f32 %v37, %v757
    %v759 = vand.u32 %v758, 4294901760
    %760 = vmatpush2.msra.mxu0 %v759
    %761 = vmatprep.subr.mxu0 0.0
    %v762 = vand.u32 %v36, 4294901760
    %v763 = vsub.f32 %v36, %v762
    %v764 = vand.u32 %v763, 4294901760
    %765 = vmatpush2.msra.mxu0 %v764
    %766 = vmatprep.subr.mxu0 0.0
    %v767 = vand.u32 %v35, 4294901760
    %v768 = vsub.f32 %v35, %v767
    %v769 = vand.u32 %v768, 4294901760
    %770 = vmatpush2.msra.mxu0 %v769
    %771 = vmatprep.subr.mxu0 0.0
    %v772 = vand.u32 %v34, 4294901760
    %v773 = vsub.f32 %v34, %v772
    %v774 = vand.u32 %v773, 4294901760
    %775 = vmatpush2.msra.mxu0 %v774
    %776 = vmatprep.subr.mxu0 0.0
    %v777 = vand.u32 %v33, 4294901760
    %v778 = vsub.f32 %v33, %v777
    %v779 = vand.u32 %v778, 4294901760
    %780 = vmatpush2.msra.mxu0 %v779
    %781 = vmatprep.subr.mxu0 0.0
    %v782 = vand.u32 %v32, 4294901760
    %v783 = vsub.f32 %v32, %v782
    %v784 = vand.u32 %v783, 4294901760
    %785 = vmatpush2.msra.mxu0 %v784
    %786 = vmatprep.subr.mxu0 0.0
    %v787 = vand.u32 %v31, 4294901760
    %v788 = vsub.f32 %v31, %v787
    %v789 = vand.u32 %v788, 4294901760
    %790 = vmatpush2.msra.mxu0 %v789
    %791 = vmatprep.subr.mxu0 0.0
    %v792 = vand.u32 %v30, 4294901760
    %v793 = vsub.f32 %v30, %v792
    %v794 = vand.u32 %v793, 4294901760
    %795 = vmatpush2.msra.mxu0 %v794
    %v796 = vand.u32 %v13, 4294901760
    %797 = vmatprep.mubr.f32.mxu0 %v796
    %v798 = vand.u32 %v12, 4294901760
    %799 = vmatmul.mubr.f32.gmra.mxu0 %v798
    %v800 = vpop.f32.mrf.mxu0
    %v801 = vadd.f32 %v633, %v800
    %v802 = vpop.f32.mrf.mxu0
    %803 = vdwg.mxu0
    %804 = vmatprep.subr.mxu0 0.0
    %v805 = vand.u32 %v29, 4294901760
    %806 = vmatpush1.msra.mxu0 %v805
    %807 = vmatprep.subr.mxu0 0.0
    %v808 = vand.u32 %v28, 4294901760
    %809 = vmatpush1.msra.mxu0 %v808
    %810 = vmatprep.subr.mxu0 0.0
    %v811 = vand.u32 %v27, 4294901760
    %812 = vmatpush1.msra.mxu0 %v811
    %813 = vmatprep.subr.mxu0 0.0
    %v814 = vand.u32 %v26, 4294901760
    %815 = vmatpush1.msra.mxu0 %v814
    %816 = vmatprep.subr.mxu0 0.0
    %v817 = vand.u32 %v25, 4294901760
    %818 = vmatpush1.msra.mxu0 %v817
    %819 = vmatprep.subr.mxu0 0.0
    %v820 = vand.u32 %v24, 4294901760
    %821 = vmatpush1.msra.mxu0 %v820
    %822 = vmatprep.subr.mxu0 0.0
    %v823 = vand.u32 %v23, 4294901760
    %824 = vmatpush1.msra.mxu0 %v823
    %825 = vmatprep.subr.mxu0 0.0
    %v826 = vand.u32 %v22, 4294901760
    %827 = vmatpush1.msra.mxu0 %v826
    %828 = vmatprep.subr.mxu0 0.0
    %v829 = vand.u32 %v21, 4294901760
    %830 = vmatpush1.msra.mxu0 %v829
    %831 = vmatprep.subr.mxu0 0.0
    %v832 = vand.u32 %v20, 4294901760
    %833 = vmatpush1.msra.mxu0 %v832
    %834 = vmatprep.subr.mxu0 0.0
    %v835 = vand.u32 %v19, 4294901760
    %836 = vmatpush1.msra.mxu0 %v835
    %837 = vmatprep.subr.mxu0 0.0
    %v838 = vand.u32 %v18, 4294901760
    %839 = vmatpush1.msra.mxu0 %v838
    %840 = vmatprep.subr.mxu0 0.0
    %v841 = vand.u32 %v17, 4294901760
    %842 = vmatpush1.msra.mxu0 %v841
    %843 = vmatprep.subr.mxu0 0.0
    %v844 = vand.u32 %v16, 4294901760
    %845 = vmatpush1.msra.mxu0 %v844
    %846 = vmatprep.subr.mxu0 0.0
    %v847 = vand.u32 %v15, 4294901760
    %848 = vmatpush1.msra.mxu0 %v847
    %849 = vmatprep.subr.mxu0 0.0
    %v850 = vand.u32 %v14, 4294901760
    %851 = vmatpush1.msra.mxu0 %v850
    %852 = vmatprep.subr.mxu0 0.0
    %v853 = vand.u32 %v45, 4294901760
    %854 = vmatpush2.msra.mxu0 %v853
    %855 = vmatprep.subr.mxu0 0.0
    %v856 = vand.u32 %v44, 4294901760
    %857 = vmatpush2.msra.mxu0 %v856
    %858 = vmatprep.subr.mxu0 0.0
    %v859 = vand.u32 %v43, 4294901760
    %860 = vmatpush2.msra.mxu0 %v859
    %861 = vmatprep.subr.mxu0 0.0
    %v862 = vand.u32 %v42, 4294901760
    %863 = vmatpush2.msra.mxu0 %v862
    %864 = vmatprep.subr.mxu0 0.0
    %v865 = vand.u32 %v41, 4294901760
    %866 = vmatpush2.msra.mxu0 %v865
    %867 = vmatprep.subr.mxu0 0.0
    %v868 = vand.u32 %v40, 4294901760
    %869 = vmatpush2.msra.mxu0 %v868
    %870 = vmatprep.subr.mxu0 0.0
    %v871 = vand.u32 %v39, 4294901760
    %872 = vmatpush2.msra.mxu0 %v871
    %873 = vmatprep.subr.mxu0 0.0
    %v874 = vand.u32 %v38, 4294901760
    %875 = vmatpush2.msra.mxu0 %v874
    %876 = vmatprep.subr.mxu0 0.0
    %v877 = vand.u32 %v37, 4294901760
    %878 = vmatpush2.msra.mxu0 %v877
    %879 = vmatprep.subr.mxu0 0.0
    %v880 = vand.u32 %v36, 4294901760
    %881 = vmatpush2.msra.mxu0 %v880
    %882 = vmatprep.subr.mxu0 0.0
    %v883 = vand.u32 %v35, 4294901760
    %884 = vmatpush2.msra.mxu0 %v883
    %885 = vmatprep.subr.mxu0 0.0
    %v886 = vand.u32 %v34, 4294901760
    %887 = vmatpush2.msra.mxu0 %v886
    %888 = vmatprep.subr.mxu0 0.0
    %v889 = vand.u32 %v33, 4294901760
    %890 = vmatpush2.msra.mxu0 %v889
    %891 = vmatprep.subr.mxu0 0.0
    %v892 = vand.u32 %v32, 4294901760
    %893 = vmatpush2.msra.mxu0 %v892
    %894 = vmatprep.subr.mxu0 0.0
    %v895 = vand.u32 %v31, 4294901760
    %896 = vmatpush2.msra.mxu0 %v895
    %897 = vmatprep.subr.mxu0 0.0
    %v898 = vand.u32 %v30, 4294901760
    %899 = vmatpush2.msra.mxu0 %v898
    %v900 = vand.u32 %v13, 4294901760
    %901 = vmatprep.mubr.f32.mxu0 %v900
    %v902 = vand.u32 %v12, 4294901760
    %903 = vmatmul.mubr.f32.gmra.mxu0 %v902
    %v904 = vpop.f32.mrf.mxu0
    %v905 = vadd.f32 %v801, %v904
    %v906 = vpop.f32.mrf.mxu0
    %907 = vdwg.mxu0
    %v908 = vmul.f32 %v905, 0.11111111
    %vm909 = vcmask 523264
    %910 = vst.msk [vmem:[#allocation2] sm:$0xff] %vm909, %v908
    // Predicated region
    $region10: #{tpu_custom_call.1} parent=1 // pred_check
      _
    $region11: #{tpu_custom_call.1} parent=1 // pred_check_branch
      %912 = sbr.rel (0) target = $region13
    $region12: #{tpu_custom_call.1} parent=1 // pred_region
      %s914 = ssub.s32 128, 128
      %915 = vsyncadd [#allocation3], %s914
      %s917 = sshll.u32 [#allocation2], 4
      %s918 = int_to_ptr.vmem [resolvable:$true] %s917
      %920 = dma.vmem_to_hbm [thread:$0]  %s918, 128, %s2, [#allocation3]
    $region13: #{tpu_custom_call.1} parent=1 // pred_fallthru
      _
    // Predicated region
    $region14: #{tpu_custom_call.1} parent=1 // pred_check
      _
    $region15: #{tpu_custom_call.1} parent=1 // pred_check_branch
      %922 = sbr.rel (0) target = $region17
    $region16: #{tpu_custom_call.1} parent=1 // pred_region
      %923 = dma.done [#allocation3], 128
    $region17: #{tpu_custom_call.1} parent=1 // pred_fallthru
      _
    %924 = vsyncpa [#allocation3], 1

</llo_original>
